<compile_context>
chip_gen: v5e
topology: v5e:2x2
jax: 0.10.0
libtpu: 0.0.40
codegen_flags: <defaults>
</compile_context>

<pallas_src>
import jax
import jax.numpy as jnp
from jax.experimental import pallas as pl
from jax.experimental.pallas import tpu as pltpu  # noqa: F401  (kept for TPU-specific tuning hooks)

# problem sizes implied by the module
B = 2            # batch
SEQ = 8          # sequence length of input_ids (only its batch dim is used by forward)
HIDDEN = 768     # nn.Linear(768, num_classes) input width
NUM_CLASSES = 2


def _classifier_kernel(h_ref, w_ref, b_ref, out_ref):
    """Single-step fused classifier.

    h_ref  : (B, HIDDEN)        bf16 hidden states
    w_ref  : (HIDDEN, NC)       bf16 classifier weight (transposed)
    b_ref  : (1, NC)            f32 classifier bias
    out_ref: (B, NC)            f32 logits (written as one full block)
    """
    logits = jnp.dot(h_ref[...], w_ref[...], preferred_element_type=jnp.float32)
    out_ref[...] = logits + b_ref[...]


def mock_bert_forward(input_ids, fc_w, fc_b, attention_mask=None, *, rng_key=None):
    """Forward pass of MockBERTModel.

    input_ids      : (B, SEQ) int32   -- only batch size is used (matches the module)
    fc_w           : (NUM_CLASSES, HIDDEN) f32
    fc_b           : (NUM_CLASSES,) f32
    attention_mask : unused (matches the module)
    Returns (logits, hidden_states) so the random hidden states are available for checking.
    """
    del attention_mask  # unused, exactly as in the PyTorch module
    batch = input_ids.shape[0]
    if rng_key is None:
        rng_key = jax.random.PRNGKey(0)

    # TODO(synk): torch.randn(batch, 768) is realised wrapper-side with jax.random.normal
    # (deterministic, exactly verifiable); an in-kernel pltpu.prng_seed/prng_random_bits
    # variant is possible but unnecessary for this mock.
    hidden_states = jax.random.normal(rng_key, (batch, HIDDEN), dtype=jnp.float32)

    # bf16 operands for the MXU, f32 accumulation inside the kernel.
    h_bf16 = hidden_states.astype(jnp.bfloat16)                       # (B, HIDDEN)
    w_bf16 = jnp.transpose(fc_w, (1, 0)).astype(jnp.bfloat16)         # (HIDDEN, NC)
    b_f32 = fc_b.reshape(1, NUM_CLASSES).astype(jnp.float32)          # (1, NC)

    cost = pl.CostEstimate(
        flops=2 * batch * HIDDEN * NUM_CLASSES,
        transcendentals=0,
        bytes_accessed=(h_bf16.size * 2 + w_bf16.size * 2
                        + b_f32.size * 4 + batch * NUM_CLASSES * 4),
    )

    # Grid fully collapsed: no grid / no BlockSpecs => whole arrays land in VMEM,
    # kernel runs once, output written as a single full (B, NC) block.
    logits = pl.pallas_call(
        _classifier_kernel,
        out_shape=jax.ShapeDtypeStruct((batch, NUM_CLASSES), jnp.float32),
        cost_estimate=cost,
    )(h_bf16, w_bf16, b_f32)

    return logits, hidden_states


if __name__ == "__main__":
    key = jax.random.PRNGKey(0)
    k_ids, k_h, k_w, k_b = jax.random.split(key, 4)

    # deterministic synthetic inputs / parameters (shapes from MockBERTModel)
    input_ids = jax.random.randint(k_ids, (B, SEQ), 0, 30522, dtype=jnp.int32)
    attention_mask = jnp.ones((B, SEQ), dtype=jnp.int32)
    fc_w = 0.05 * jax.random.normal(k_w, (NUM_CLASSES, HIDDEN), dtype=jnp.float32)
    fc_b = 0.05 * jax.random.normal(k_b, (NUM_CLASSES,), dtype=jnp.float32)

    logits, hidden = mock_bert_forward(
        input_ids, fc_w, fc_b, attention_mask, rng_key=k_h)
    jax.block_until_ready(logits)

    # pure-JAX reference of the classifier on the same hidden states
    ref = hidden @ fc_w.T + fc_b
    assert logits.shape == (B, NUM_CLASSES), logits.shape
    assert jnp.allclose(logits, ref, rtol=2e-2, atol=2e-2), (logits, ref)

    print("KERNEL_OK")
</pallas_src>

<mosaic_0001>
module attributes {stable_mosaic.version = 11 : i64} {
  func.func @_classifier_kernel(%arg0: memref<2x768xbf16, #tpu.memory_space<vmem>>, %arg1: memref<768x2xbf16, #tpu.memory_space<vmem>>, %arg2: memref<1x2xf32, #tpu.memory_space<vmem>>, %arg3: memref<2x2xf32, #tpu.memory_space<vmem>>) attributes {dimension_semantics = [], scalar_prefetch = 0 : i64, scratch_operands = 0 : i64, tpu.core_type = #tpu.core_type<tc>} {
    %c0 = arith.constant 0 : index
    %c0_0 = arith.constant 0 : index
    %0 = vector.load %arg0[%c0, %c0_0] : memref<2x768xbf16, #tpu.memory_space<vmem>>, vector<2x768xbf16>
    %c0_1 = arith.constant 0 : index
    %c0_2 = arith.constant 0 : index
    %1 = vector.load %arg1[%c0_1, %c0_2] : memref<768x2xbf16, #tpu.memory_space<vmem>>, vector<768x2xbf16>
    %cst = arith.constant dense<0.000000e+00> : vector<2x2xf32>
    %2 = tpu.matmul %0, %1, %cst {dimension_numbers = #tpu.dot_dimension_numbers<[1], [0], [0], [1], [0, 0, 1, 1], [], []>} : vector<2x768xbf16>, vector<768x2xbf16>, vector<2x2xf32> -> vector<2x2xf32>
    %c0_3 = arith.constant 0 : index
    %c0_4 = arith.constant 0 : index
    %3 = vector.load %arg2[%c0_3, %c0_4] : memref<1x2xf32, #tpu.memory_space<vmem>>, vector<1x2xf32>
    %4 = vector.broadcast %3 : vector<1x2xf32> to vector<2x2xf32>
    %5 = arith.addf %2, %4 : vector<2x2xf32>
    %c0_5 = arith.constant 0 : index
    %c0_6 = arith.constant 0 : index
    %6 = vector.load %arg3[%c0_5, %c0_6] : memref<2x2xf32, #tpu.memory_space<vmem>>, vector<2x2xf32>
    tpu.vector_store %arg3[%c0_5, %c0_6], %5 {strides = array<i32>} : memref<2x2xf32, #tpu.memory_space<vmem>>, vector<2x2xf32>,
    return
  }
}

</mosaic_0001>

<llo_original>
// kernel: tpu_custom_call.1
$region0: #{tpu_custom_call.1}
  #allocation0 [shape = 'u32[]', space=smem, size = 0x4, offset = 0x4, fixed_abs, tag = 'smem constant byte address 0x4 - core index']
  #allocation1 [shape = 'u32[72,128]{1,0:T(1,128)}', space=vmem, size = 0x9000, scoped, tag = 'internal scratch']
  %s0 = inlined_call_operand.vmem [shape: bf16[2,768], index: 0, kind: input, shape index: {}]
  %s1 = inlined_call_operand.vmem [shape: bf16[768,2], index: 1, kind: input, shape index: {}]
  %s2 = inlined_call_operand.vmem [shape: f32[1,2], index: 2, kind: input, shape index: {}]
  %s3 = inlined_call_operand.hbm [shape: f32[2,2], index: 3, kind: output, shape index: {}]
  %s4 = sld [smem:[#allocation0]]
  $region22: #{tpu_custom_call.1} parent=0
    _
  %s6 = ssub.s32 1, %s4
  %s7 = scalar_select 0, %s6, %s4
  $region1: #{tpu_custom_call.1} parent=0
    #allocation2 [shape = 'u8[1024]{0}', space=vmem, size = 0x400, scoped, tag = 'output window, operand 0, single buffered']
    #allocation3 [shape = 's32[1]{0}', space=sflag, size = 0x4, scoped, tag = 'scoped memory for tpu_custom_call.1']
    %8 = vsyncpa [#allocation3], 0
    // Predicated region
    $region2: #{tpu_custom_call.1} parent=1 // pred_check
      _
    $region3: #{tpu_custom_call.1} parent=1 // pred_check_branch
      %10 = sbr.rel (0) target = $region5
    $region4: #{tpu_custom_call.1} parent=1 // pred_region
      _
    $region5: #{tpu_custom_call.1} parent=1 // pred_fallthru
      _
    // Predicated region
    $region6: #{tpu_custom_call.1} parent=1 // pred_check
      _
    $region7: #{tpu_custom_call.1} parent=1 // pred_check_branch
      %12 = sbr.rel (0) target = $region9
    $region8: #{tpu_custom_call.1} parent=1 // pred_region
      _
    $region9: #{tpu_custom_call.1} parent=1 // pred_fallthru
      _
    // Predicated region
    $region10: #{tpu_custom_call.1} parent=1 // pred_check
      _
    $region11: #{tpu_custom_call.1} parent=1 // pred_check_branch
      %14 = sbr.rel (0) target = $region13
    $region12: #{tpu_custom_call.1} parent=1 // pred_region
      _
    $region13: #{tpu_custom_call.1} parent=1 // pred_fallthru
      _
    %v15 = vld [vmem:[%s0] sm:$0x3f]
    %v16 = vld [vmem:[%s1] sm:$0xf]
    %v17 = vld [vmem:[%s1 + $0x4] sm:$0xf]
    %v18 = vld [vmem:[%s1 + $0x8] sm:$0xf]
    %v19 = vld [vmem:[%s1 + $0xc] sm:$0xf]
    %v20 = vld [vmem:[%s1 + $0x10] sm:$0xf]
    %v21 = vld [vmem:[%s1 + $0x14] sm:$0xf]
    %v22 = vld [vmem:[%s1 + $0x18] sm:$0xf]
    %v23 = vld [vmem:[%s1 + $0x1c] sm:$0xf]
    %v24 = vld [vmem:[%s1 + $0x20] sm:$0xf]
    %v25 = vld [vmem:[%s1 + $0x24] sm:$0xf]
    %v26 = vld [vmem:[%s1 + $0x28] sm:$0xf]
    %v27 = vld [vmem:[%s1 + $0x2c] sm:$0xf]
    %v28 = vld [vmem:[%s1 + $0x30] sm:$0xf]
    %v29 = vld [vmem:[%s1 + $0x34] sm:$0xf]
    %v30 = vld [vmem:[%s1 + $0x38] sm:$0xf]
    %v31 = vld [vmem:[%s1 + $0x3c] sm:$0xf]
    %v32 = vld [vmem:[%s1 + $0x40] sm:$0xf]
    %v33 = vld [vmem:[%s1 + $0x44] sm:$0xf]
    %v34 = vld [vmem:[%s1 + $0x48] sm:$0xf]
    %v35 = vld [vmem:[%s1 + $0x4c] sm:$0xf]
    %v36 = vld [vmem:[%s1 + $0x50] sm:$0xf]
    %v37 = vld [vmem:[%s1 + $0x54] sm:$0xf]
    %v38 = vld [vmem:[%s1 + $0x58] sm:$0xf]
    %v39 = vld [vmem:[%s1 + $0x5c] sm:$0xf]
    %v40 = vld [vmem:[%s1 + $0x60] sm:$0xf]
    %v41 = vld [vmem:[%s1 + $0x64] sm:$0xf]
    %v42 = vld [vmem:[%s1 + $0x68] sm:$0xf]
    %v43 = vld [vmem:[%s1 + $0x6c] sm:$0xf]
    %v44 = vld [vmem:[%s1 + $0x70] sm:$0xf]
    %v45 = vld [vmem:[%s1 + $0x74] sm:$0xf]
    %v46 = vld [vmem:[%s1 + $0x78] sm:$0xf]
    %v47 = vld [vmem:[%s1 + $0x7c] sm:$0xf]
    %v48 = vld [vmem:[%s1 + $0x80] sm:$0xf]
    %v49 = vld [vmem:[%s1 + $0x84] sm:$0xf]
    %v50 = vld [vmem:[%s1 + $0x88] sm:$0xf]
    %v51 = vld [vmem:[%s1 + $0x8c] sm:$0xf]
    %v52 = vld [vmem:[%s1 + $0x90] sm:$0xf]
    %v53 = vld [vmem:[%s1 + $0x94] sm:$0xf]
    %v54 = vld [vmem:[%s1 + $0x98] sm:$0xf]
    %v55 = vld [vmem:[%s1 + $0x9c] sm:$0xf]
    %v56 = vld [vmem:[%s1 + $0xa0] sm:$0xf]
    %v57 = vld [vmem:[%s1 + $0xa4] sm:$0xf]
    %v58 = vld [vmem:[%s1 + $0xa8] sm:$0xf]
    %v59 = vld [vmem:[%s1 + $0xac] sm:$0xf]
    %v60 = vld [vmem:[%s1 + $0xb0] sm:$0xf]
    %v61 = vld [vmem:[%s1 + $0xb4] sm:$0xf]
    %v62 = vld [vmem:[%s1 + $0xb8] sm:$0xf]
    %v63 = vld [vmem:[%s1 + $0xbc] sm:$0xf]
    %v64 = vld [vmem:[%s1 + $0xc0] sm:$0xf]
    %v65 = vld [vmem:[%s1 + $0xc4] sm:$0xf]
    %v66 = vld [vmem:[%s1 + $0xc8] sm:$0xf]
    %v67 = vld [vmem:[%s1 + $0xcc] sm:$0xf]
    %v68 = vld [vmem:[%s1 + $0xd0] sm:$0xf]
    %v69 = vld [vmem:[%s1 + $0xd4] sm:$0xf]
    %v70 = vld [vmem:[%s1 + $0xd8] sm:$0xf]
    %v71 = vld [vmem:[%s1 + $0xdc] sm:$0xf]
    %v72 = vld [vmem:[%s1 + $0xe0] sm:$0xf]
    %v73 = vld [vmem:[%s1 + $0xe4] sm:$0xf]
    %v74 = vld [vmem:[%s1 + $0xe8] sm:$0xf]
    %v75 = vld [vmem:[%s1 + $0xec] sm:$0xf]
    %v76 = vld [vmem:[%s1 + $0xf0] sm:$0xf]
    %v77 = vld [vmem:[%s1 + $0xf4] sm:$0xf]
    %v78 = vld [vmem:[%s1 + $0xf8] sm:$0xf]
    %v79 = vld [vmem:[%s1 + $0xfc] sm:$0xf]
    %v80 = vld [vmem:[%s1 + $0x100] sm:$0xf]
    %v81 = vld [vmem:[%s1 + $0x104] sm:$0xf]
    %v82 = vld [vmem:[%s1 + $0x108] sm:$0xf]
    %v83 = vld [vmem:[%s1 + $0x10c] sm:$0xf]
    %v84 = vld [vmem:[%s1 + $0x110] sm:$0xf]
    %v85 = vld [vmem:[%s1 + $0x114] sm:$0xf]
    %v86 = vld [vmem:[%s1 + $0x118] sm:$0xf]
    %v87 = vld [vmem:[%s1 + $0x11c] sm:$0xf]
    %v88 = vld [vmem:[%s1 + $0x120] sm:$0xf]
    %v89 = vld [vmem:[%s1 + $0x124] sm:$0xf]
    %v90 = vld [vmem:[%s1 + $0x128] sm:$0xf]
    %v91 = vld [vmem:[%s1 + $0x12c] sm:$0xf]
    %v92 = vld [vmem:[%s1 + $0x130] sm:$0xf]
    %v93 = vld [vmem:[%s1 + $0x134] sm:$0xf]
    %v94 = vld [vmem:[%s1 + $0x138] sm:$0xf]
    %v95 = vld [vmem:[%s1 + $0x13c] sm:$0xf]
    %v96 = vld [vmem:[%s1 + $0x140] sm:$0xf]
    %v97 = vld [vmem:[%s1 + $0x144] sm:$0xf]
    %v98 = vld [vmem:[%s1 + $0x148] sm:$0xf]
    %v99 = vld [vmem:[%s1 + $0x14c] sm:$0xf]
    %v100 = vld [vmem:[%s1 + $0x150] sm:$0xf]
    %v101 = vld [vmem:[%s1 + $0x154] sm:$0xf]
    %v102 = vld [vmem:[%s1 + $0x158] sm:$0xf]
    %v103 = vld [vmem:[%s1 + $0x15c] sm:$0xf]
    %v104 = vld [vmem:[%s1 + $0x160] sm:$0xf]
    %v105 = vld [vmem:[%s1 + $0x164] sm:$0xf]
    %v106 = vld [vmem:[%s1 + $0x168] sm:$0xf]
    %v107 = vld [vmem:[%s1 + $0x16c] sm:$0xf]
    %v108 = vld [vmem:[%s1 + $0x170] sm:$0xf]
    %v109 = vld [vmem:[%s1 + $0x174] sm:$0xf]
    %v110 = vld [vmem:[%s1 + $0x178] sm:$0xf]
    %v111 = vld [vmem:[%s1 + $0x17c] sm:$0xf]
    %v112 = vld [vmem:[%s2] sm:$0x1]
    %v114 = vperm.slane %v112, 0
    %117 = vst [vmem:[#allocation1] ss:$9 sm:$0xff] %v15
    %v118 = vld [vmem:[#allocation1] sm:$0xff]
    %v119 = vld [vmem:[#allocation1 + $0x9] sm:$0xff]
    %v120 = vld [vmem:[#allocation1 + $0x12] sm:$0xff]
    %v121 = vld [vmem:[#allocation1 + $0x1b] sm:$0xff]
    %v122 = vld [vmem:[#allocation1 + $0x24] sm:$0xff]
    %v123 = vld [vmem:[#allocation1 + $0x2d] sm:$0xff]
    %v226 = vunpack.c.l.b16 %v16
    %v227 = vunpack.c.l.b16 %v17
    %v228 = vunpack.c.l.b16 %v18
    %v229 = vunpack.c.l.b16 %v19
    %v230 = vunpack.c.l.b16 %v20
    %v231 = vunpack.c.l.b16 %v21
    %v232 = vunpack.c.l.b16 %v22
    %v233 = vunpack.c.l.b16 %v23
    %v234 = vunpack.c.l.b16 %v24
    %v235 = vunpack.c.l.b16 %v25
    %v236 = vunpack.c.l.b16 %v26
    %v237 = vunpack.c.l.b16 %v27
    %v238 = vunpack.c.l.b16 %v28
    %v239 = vunpack.c.l.b16 %v29
    %v240 = vunpack.c.l.b16 %v30
    %v241 = vunpack.c.l.b16 %v31
    %v242 = vunpack.c.l.b16 %v32
    %v243 = vunpack.c.l.b16 %v33
    %v244 = vunpack.c.l.b16 %v34
    %v245 = vunpack.c.l.b16 %v35
    %v246 = vunpack.c.l.b16 %v36
    %v247 = vunpack.c.l.b16 %v37
    %v248 = vunpack.c.l.b16 %v38
    %v249 = vunpack.c.l.b16 %v39
    %v250 = vunpack.c.l.b16 %v40
    %v251 = vunpack.c.l.b16 %v41
    %v252 = vunpack.c.l.b16 %v42
    %v253 = vunpack.c.l.b16 %v43
    %v254 = vunpack.c.l.b16 %v44
    %v255 = vunpack.c.l.b16 %v45
    %v256 = vunpack.c.l.b16 %v46
    %v257 = vunpack.c.l.b16 %v47
    %v258 = vunpack.c.l.b16 %v48
    %v259 = vunpack.c.l.b16 %v49
    %v260 = vunpack.c.l.b16 %v50
    %v261 = vunpack.c.l.b16 %v51
    %v262 = vunpack.c.l.b16 %v52
    %v263 = vunpack.c.l.b16 %v53
    %v264 = vunpack.c.l.b16 %v54
    %v265 = vunpack.c.l.b16 %v55
    %v266 = vunpack.c.l.b16 %v56
    %v267 = vunpack.c.l.b16 %v57
    %v268 = vunpack.c.l.b16 %v58
    %v269 = vunpack.c.l.b16 %v59
    %v270 = vunpack.c.l.b16 %v60
    %v271 = vunpack.c.l.b16 %v61
    %v272 = vunpack.c.l.b16 %v62
    %v273 = vunpack.c.l.b16 %v63
    %v274 = vunpack.c.l.b16 %v64
    %v275 = vunpack.c.l.b16 %v65
    %v276 = vunpack.c.l.b16 %v66
    %v277 = vunpack.c.l.b16 %v67
    %v278 = vunpack.c.l.b16 %v68
    %v279 = vunpack.c.l.b16 %v69
    %v280 = vunpack.c.l.b16 %v70
    %v281 = vunpack.c.l.b16 %v71
    %v282 = vunpack.c.l.b16 %v72
    %v283 = vunpack.c.l.b16 %v73
    %v284 = vunpack.c.l.b16 %v74
    %v285 = vunpack.c.l.b16 %v75
    %v286 = vunpack.c.l.b16 %v76
    %v287 = vunpack.c.l.b16 %v77
    %v288 = vunpack.c.l.b16 %v78
    %v289 = vunpack.c.l.b16 %v79
    %v290 = vunpack.c.l.b16 %v80
    %v291 = vunpack.c.l.b16 %v81
    %v292 = vunpack.c.l.b16 %v82
    %v293 = vunpack.c.l.b16 %v83
    %v294 = vunpack.c.l.b16 %v84
    %v295 = vunpack.c.l.b16 %v85
    %v296 = vunpack.c.l.b16 %v86
    %v297 = vunpack.c.l.b16 %v87
    %v298 = vunpack.c.l.b16 %v88
    %v299 = vunpack.c.l.b16 %v89
    %v300 = vunpack.c.l.b16 %v90
    %v301 = vunpack.c.l.b16 %v91
    %v302 = vunpack.c.l.b16 %v92
    %v303 = vunpack.c.l.b16 %v93
    %v304 = vunpack.c.l.b16 %v94
    %v305 = vunpack.c.l.b16 %v95
    %v306 = vunpack.c.l.b16 %v96
    %v307 = vunpack.c.l.b16 %v97
    %v308 = vunpack.c.l.b16 %v98
    %v309 = vunpack.c.l.b16 %v99
    %v310 = vunpack.c.l.b16 %v100
    %v311 = vunpack.c.l.b16 %v101
    %v312 = vunpack.c.l.b16 %v102
    %v313 = vunpack.c.l.b16 %v103
    %v314 = vunpack.c.l.b16 %v104
    %v315 = vunpack.c.l.b16 %v105
    %v316 = vunpack.c.l.b16 %v106
    %v317 = vunpack.c.l.b16 %v107
    %v318 = vunpack.c.l.b16 %v108
    %v319 = vunpack.c.l.b16 %v109
    %v320 = vunpack.c.l.b16 %v110
    %v321 = vunpack.c.l.b16 %v111
    %v322 = vpack.c.b16 %v227, %v226
    %v323 = vpack.c.b16 %v229, %v228
    %v324 = vpack.c.b16 %v231, %v230
    %v325 = vpack.c.b16 %v233, %v232
    %v326 = vpack.c.b16 %v235, %v234
    %v327 = vpack.c.b16 %v237, %v236
    %v328 = vpack.c.b16 %v239, %v238
    %v329 = vpack.c.b16 %v241, %v240
    %v330 = vpack.c.b16 %v243, %v242
    %v331 = vpack.c.b16 %v245, %v244
    %v332 = vpack.c.b16 %v247, %v246
    %v333 = vpack.c.b16 %v249, %v248
    %v334 = vpack.c.b16 %v251, %v250
    %v335 = vpack.c.b16 %v253, %v252
    %v336 = vpack.c.b16 %v255, %v254
    %v337 = vpack.c.b16 %v257, %v256
    %v338 = vpack.c.b16 %v259, %v258
    %v339 = vpack.c.b16 %v261, %v260
    %v340 = vpack.c.b16 %v263, %v262
    %v341 = vpack.c.b16 %v265, %v264
    %v342 = vpack.c.b16 %v267, %v266
    %v343 = vpack.c.b16 %v269, %v268
    %v344 = vpack.c.b16 %v271, %v270
    %v345 = vpack.c.b16 %v273, %v272
    %v346 = vpack.c.b16 %v275, %v274
    %v347 = vpack.c.b16 %v277, %v276
    %v348 = vpack.c.b16 %v279, %v278
    %v349 = vpack.c.b16 %v281, %v280
    %v350 = vpack.c.b16 %v283, %v282
    %v351 = vpack.c.b16 %v285, %v284
    %v352 = vpack.c.b16 %v287, %v286
    %v353 = vpack.c.b16 %v289, %v288
    %v354 = vpack.c.b16 %v291, %v290
    %v355 = vpack.c.b16 %v293, %v292
    %v356 = vpack.c.b16 %v295, %v294
    %v357 = vpack.c.b16 %v297, %v296
    %v358 = vpack.c.b16 %v299, %v298
    %v359 = vpack.c.b16 %v301, %v300
    %v360 = vpack.c.b16 %v303, %v302
    %v361 = vpack.c.b16 %v305, %v304
    %v362 = vpack.c.b16 %v307, %v306
    %v363 = vpack.c.b16 %v309, %v308
    %v364 = vpack.c.b16 %v311, %v310
    %v365 = vpack.c.b16 %v313, %v312
    %v366 = vpack.c.b16 %v315, %v314
    %v367 = vpack.c.b16 %v317, %v316
    %v368 = vpack.c.b16 %v319, %v318
    %v369 = vpack.c.b16 %v321, %v320
    %418 = vmatpush.bf16.msra.mxu0 %v329
    %419 = vmatpush.bf16.msra.mxu0 %v328
    %420 = vmatpush.bf16.msra.mxu0 %v327
    %421 = vmatpush.bf16.msra.mxu0 %v326
    %422 = vmatpush.bf16.msra.mxu0 %v325
    %423 = vmatpush.bf16.msra.mxu0 %v324
    %424 = vmatpush.bf16.msra.mxu0 %v323
    %425 = vmatpush.bf16.msra.mxu0 %v322
    %426 = vmatmul.bf16.gmra.mxu0 %v118
    %v427 = vpop.f32.mrf.mxu0
    %v428 = vadd.f32 %v114, %v427
    %v429 = vpop.f32.mrf.mxu0
    %430 = vdwg.mxu0
    %431 = vmatpush.bf16.msra.mxu0 %v337
    %432 = vmatpush.bf16.msra.mxu0 %v336
    %433 = vmatpush.bf16.msra.mxu0 %v335
    %434 = vmatpush.bf16.msra.mxu0 %v334
    %435 = vmatpush.bf16.msra.mxu0 %v333
    %436 = vmatpush.bf16.msra.mxu0 %v332
    %437 = vmatpush.bf16.msra.mxu0 %v331
    %438 = vmatpush.bf16.msra.mxu0 %v330
    %439 = vmatmul.bf16.gmra.mxu0 %v119
    %v440 = vpop.f32.mrf.mxu0
    %v441 = vadd.f32 %v428, %v440
    %v442 = vpop.f32.mrf.mxu0
    %443 = vdwg.mxu0
    %444 = vmatpush.bf16.msra.mxu0 %v345
    %445 = vmatpush.bf16.msra.mxu0 %v344
    %446 = vmatpush.bf16.msra.mxu0 %v343
    %447 = vmatpush.bf16.msra.mxu0 %v342
    %448 = vmatpush.bf16.msra.mxu0 %v341
    %449 = vmatpush.bf16.msra.mxu0 %v340
    %450 = vmatpush.bf16.msra.mxu0 %v339
    %451 = vmatpush.bf16.msra.mxu0 %v338
    %452 = vmatmul.bf16.gmra.mxu0 %v120
    %v453 = vpop.f32.mrf.mxu0
    %v454 = vadd.f32 %v441, %v453
    %v455 = vpop.f32.mrf.mxu0
    %456 = vdwg.mxu0
    %457 = vmatpush.bf16.msra.mxu0 %v353
    %458 = vmatpush.bf16.msra.mxu0 %v352
    %459 = vmatpush.bf16.msra.mxu0 %v351
    %460 = vmatpush.bf16.msra.mxu0 %v350
    %461 = vmatpush.bf16.msra.mxu0 %v349
    %462 = vmatpush.bf16.msra.mxu0 %v348
    %463 = vmatpush.bf16.msra.mxu0 %v347
    %464 = vmatpush.bf16.msra.mxu0 %v346
    %465 = vmatmul.bf16.gmra.mxu0 %v121
    %v466 = vpop.f32.mrf.mxu0
    %v467 = vadd.f32 %v454, %v466
    %v468 = vpop.f32.mrf.mxu0
    %469 = vdwg.mxu0
    %470 = vmatpush.bf16.msra.mxu0 %v361
    %471 = vmatpush.bf16.msra.mxu0 %v360
    %472 = vmatpush.bf16.msra.mxu0 %v359
    %473 = vmatpush.bf16.msra.mxu0 %v358
    %474 = vmatpush.bf16.msra.mxu0 %v357
    %475 = vmatpush.bf16.msra.mxu0 %v356
    %476 = vmatpush.bf16.msra.mxu0 %v355
    %477 = vmatpush.bf16.msra.mxu0 %v354
    %478 = vmatmul.bf16.gmra.mxu0 %v122
    %v479 = vpop.f32.mrf.mxu0
    %v480 = vadd.f32 %v467, %v479
    %v481 = vpop.f32.mrf.mxu0
    %482 = vdwg.mxu0
    %483 = vmatpush.bf16.msra.mxu0 %v369
    %484 = vmatpush.bf16.msra.mxu0 %v368
    %485 = vmatpush.bf16.msra.mxu0 %v367
    %486 = vmatpush.bf16.msra.mxu0 %v366
    %487 = vmatpush.bf16.msra.mxu0 %v365
    %488 = vmatpush.bf16.msra.mxu0 %v364
    %489 = vmatpush.bf16.msra.mxu0 %v363
    %490 = vmatpush.bf16.msra.mxu0 %v362
    %491 = vmatmul.bf16.gmra.mxu0 %v123
    %v492 = vpop.f32.mrf.mxu0
    %v493 = vadd.f32 %v480, %v492
    %v494 = vpop.f32.mrf.mxu0
    %495 = vdwg.mxu0
    %vm496 = vcmask 9216
    %497 = vst.msk [vmem:[#allocation2] sm:$0x3] %vm496, %v493
    // Predicated region
    $region14: #{tpu_custom_call.1} parent=1 // pred_check
      _
    $region15: #{tpu_custom_call.1} parent=1 // pred_check_branch
      %499 = sbr.rel (0) target = $region17
    $region16: #{tpu_custom_call.1} parent=1 // pred_region
      %501 = vsyncadd [#allocation3], 0
      %s503 = sshll.u32 [#allocation2], 4
      %s504 = int_to_ptr.vmem [resolvable:$true] %s503
      %s505 = sshll.u32 %s3, 4
      %s506 = int_to_ptr.hbm [resolvable:$true] %s505
      %508 = dma.vmem_to_hbm [thread:$0]  %s504, 32, %s506, [#allocation3]
    $region17: #{tpu_custom_call.1} parent=1 // pred_fallthru
      _
    // Predicated region
    $region18: #{tpu_custom_call.1} parent=1 // pred_check
      _
    $region19: #{tpu_custom_call.1} parent=1 // pred_check_branch
      %510 = sbr.rel (0) target = $region21
    $region20: #{tpu_custom_call.1} parent=1 // pred_region
      %512 = dma.done [#allocation3], 32
    $region21: #{tpu_custom_call.1} parent=1 // pred_fallthru
      _
    %513 = vsyncpa [#allocation3], 1

</llo_original>
